<compile_context>
chip_gen: v7x
topology: tpu7x:2x2x1
jax: 0.10.0
libtpu: 0.0.40
codegen_flags: <defaults>
</compile_context>

<pallas_src>
import jax
import jax.numpy as jnp
import numpy as np
from jax.experimental import pallas as pl
from jax.experimental.pallas import tpu as pltpu


def attention_kernel(lens_ref, q_ref, k_ref, v_ref, out_ref, attn_ref):
    # Block views: lens (BN,1) i32, q (BN,D), k (BN,T,D), v (BN,T,Dv)
    q = q_ref[...]                         # (BN, D)   input dtype (bf16 stays packed)
    k = k_ref[...]                         # (BN, T, D)
    v = v_ref[...]                         # (BN, T, Dv)
    lens = lens_ref[...]                   # (BN, 1) int32

    BN, T, _ = k.shape
    Dv = v.shape[-1]
    Tp = attn_ref.shape[-1]                # padded (lane-dense) output dims
    Dvp = out_ref.shape[-1]

    # energy[b, t] = <key[b, t, :], query[b, :]>
    # VPU broadcast-multiply + lane-axis reduce, f32 accumulation; no full-block f32 copies.
    # TODO(synk): if a bundle dump shows the XLU (lane-reduce) slot binding for small D, take key
    # pre-transposed as (N, D, T) so this becomes a sublane reduce; skipped here because it would
    # need an HBM-side transpose of key (extra traffic for a mem-bound kernel).
    energy = jnp.sum(k * q[:, None, :], axis=-1, dtype=jnp.float32)        # (BN, T) f32

    # masked_fill_(t >= lens[b], -1e9), vectorized over the whole batch block
    t_idx = jax.lax.broadcasted_iota(jnp.int32, (BN, T), 1)
    energy = jnp.where(t_idx >= lens, jnp.float32(-1000000000.0), energy)

    # Pad the time axis so the attention writeback is lane-dense; padded columns softmax to ~0.
    if Tp != T:
        pad = jnp.full((BN, Tp - T), -1000000000.0, dtype=jnp.float32)
        energy = jnp.concatenate([energy, pad], axis=-1)                   # (BN, Tp)

    # Softmax over the time axis. Exact divide (not approx reciprocal) so the returned weights
    # sum to 1 exactly like PyTorch softmax; the divide is off the HBM-bound critical path.
    m = jnp.max(energy, axis=-1, keepdims=True)
    e = jnp.exp(energy - m)
    s = jnp.sum(e, axis=-1, keepdims=True)
    attn = e / s                                                           # (BN, Tp) f32
    attn_ref[...] = attn.astype(attn_ref.dtype)

    # context[b, :] = sum_t attn[b, t] * value[b, t, :] — VPU broadcast + sublane reduce, f32 acc.
    w = attn[:, :T].astype(v.dtype)
    ctx = jnp.sum(w[:, :, None] * v, axis=1, dtype=jnp.float32)            # (BN, Dv)
    if Dvp != Dv:
        ctx = jnp.concatenate([ctx, jnp.zeros((BN, Dvp - Dv), jnp.float32)], axis=-1)
    out_ref[...] = ctx.astype(out_ref.dtype)


def _round_up(x, m):
    return ((x + m - 1) // m) * m


def _vmem_caps():
    """(hard vmem_limit cap, working budget for BN sizing) in bytes, per TPU generation."""
    try:
        cap = int(getattr(pltpu.get_tpu_info(), "vmem_capacity_bytes"))
    except Exception:
        cap = 64 << 20  # assume the smallest per-core VMEM (v7x) if the query is unavailable
    return (cap * 3) // 4, (cap * 3) // 8    # ~75% hard cap, ~37.5% working budget


def _per_row_vmem_bytes(T, D, Dv, Tp, Dvp, in_isz, out_isz, attn_isz):
    """Conservative VMEM bytes per batch row: double-buffered blocks + in-kernel temporaries."""
    in_row = (T * (D + Dv) + D) * in_isz + 4                      # key + value + query + lens(i32)
    out_row = Dvp * out_isz + Tp * attn_isz                       # context + attention weights
    # Largest streamed product temporary (input dtype) + f32 energy/attn/ctx row vectors.
    tmp_row = max(T * D, T * Dv) * in_isz + 4 * (2 * Tp + Dvp)
    return 2 * (in_row + out_row) + tmp_row                       # 2x = double-buffered pipeline


def _choose_block_batch(N, per_row, budget):
    bn = int(budget // max(per_row, 1))
    if bn >= N:
        bn = N
        if N >= 16:
            # Keep >= 2 grid steps so ("parallel",) can shard the batch over both v7x TensorCores.
            bn = max(8, ((N // 2) // 8) * 8)
    else:
        # TODO(synk): for very long T (bn < 8) stream K/V over a trailing "arbitrary" T grid axis
        # with an online-softmax accumulator instead of clamping BN up to 8 rows, which can
        # overshoot the VMEM budget.
        bn = max(8, (bn // 8) * 8)
    return min(bn, N)


def attention_forward(query, key, value, lens, *, block_batch=None, attn_dtype=jnp.float32):
    """query (N, D), key (N, T, D), value (N, T, Dv), lens (N,) int.
    Returns (context (N, Dv), attention (N, T))."""
    N, T, D = key.shape
    Dv = value.shape[2]
    in_isz = key.dtype.itemsize
    out_dtype = value.dtype
    attn_np_dtype = np.dtype(attn_dtype)

    # Lane-dense output padding: only when the dim is already >= 128 (extra writeback < 2x) and
    # not a multiple of 128. The padding exists only in the outputs — K/V are never copied in HBM.
    Tp = _round_up(T, 128) if (T > 128 and T % 128) else T
    Dvp = _round_up(Dv, 128) if (Dv > 128 and Dv % 128) else Dv

    vmem_cap, vmem_budget = _vmem_caps()
    per_row = _per_row_vmem_bytes(T, D, Dv, Tp, Dvp, in_isz,
                                  out_dtype.itemsize, attn_np_dtype.itemsize)
    if block_batch is None:
        BN = _choose_block_batch(N, per_row, vmem_budget)
    else:
        BN = min(int(block_batch), N)
    grid = (pl.cdiv(N, BN),)

    # One consistent accounting for the compiler limit, capped well under physical VMEM
    # (64 MiB/TC on v7x, 128 MiB on v5e/v6e); the explicit limit also lifts v5e's 16 MiB default.
    vmem_limit = int(min(max(BN * per_row + (2 << 20), 32 << 20), vmem_cap))

    lens2 = lens.astype(jnp.int32).reshape(N, 1)

    flops = 2 * N * T * D + 2 * N * T * Dv + 5 * N * T
    bytes_accessed = ((query.size + key.size + value.size) * in_isz
                      + N * 4
                      + N * Dvp * out_dtype.itemsize
                      + N * Tp * attn_np_dtype.itemsize)

    out, attn = pl.pallas_call(
        attention_kernel,
        out_shape=(
            jax.ShapeDtypeStruct((N, Dvp), out_dtype),
            jax.ShapeDtypeStruct((N, Tp), attn_np_dtype),
        ),
        grid_spec=pltpu.PrefetchScalarGridSpec(
            num_scalar_prefetch=0,
            grid=grid,
            in_specs=[
                pl.BlockSpec((BN, 1), lambda b: (b, 0)),          # lens
                pl.BlockSpec((BN, D), lambda b: (b, 0)),          # query
                pl.BlockSpec((BN, T, D), lambda b: (b, 0, 0)),    # key
                pl.BlockSpec((BN, T, Dv), lambda b: (b, 0, 0)),   # value
            ],
            out_specs=(
                pl.BlockSpec((BN, Dvp), lambda b: (b, 0)),        # context
                pl.BlockSpec((BN, Tp), lambda b: (b, 0)),         # attention weights
            ),
        ),
        compiler_params=pltpu.CompilerParams(
            dimension_semantics=("parallel",),     # shards blocked batch axis across v7x's 2 TCs
            vmem_limit_bytes=vmem_limit,
        ),
        cost_estimate=pl.CostEstimate(
            flops=flops,
            transcendentals=N * Tp,
            bytes_accessed=bytes_accessed,
        ),
    )(lens2, query, key, value)

    if Dvp != Dv:
        out = out[:, :Dv]
    if Tp != T:
        attn = attn[:, :T]
    return out, attn


def attention_ref(query, key, value, lens):
    # Pure-JAX reference mirroring the PyTorch forward exactly.
    energy = jnp.einsum("ntd,nd->nt", key, query)
    mask = jnp.arange(key.shape[1])[None, :] >= lens[:, None]
    energy = jnp.where(mask, -1000000000.0, energy)
    attn = jax.nn.softmax(energy, axis=1)
    out = jnp.einsum("nt,ntv->nv", attn, value)
    return out, attn


if __name__ == "__main__":
    # Case 1: tiny shapes implied by the forward (single grid step).
    N, T, D, Dv = 2, 8, 32, 32
    k0, k1, k2 = jax.random.split(jax.random.PRNGKey(0), 3)
    query = jax.random.normal(k0, (N, D), dtype=jnp.float32)
    key = jax.random.normal(k1, (N, T, D), dtype=jnp.float32)
    value = jax.random.normal(k2, (N, T, Dv), dtype=jnp.float32)
    lens = jnp.array([5, 8], dtype=jnp.int32)

    out, attn = attention_forward(query, key, value, lens)
    out, attn = jax.block_until_ready((out, attn))
    out_r, attn_r = attention_ref(query, key, value, lens)
    np.testing.assert_allclose(np.asarray(out), np.asarray(out_r), rtol=1e-5, atol=1e-5)
    np.testing.assert_allclose(np.asarray(attn), np.asarray(attn_r), rtol=1e-5, atol=1e-5)

    # Case 2: exercises the blocked batch axis (BN=8, grid=(2,)) chosen by the auto-sizer.
    N2, T2, D2, Dv2 = 16, 8, 32, 32
    k3, k4, k5, k6 = jax.random.split(jax.random.PRNGKey(1), 4)
    query2 = jax.random.normal(k3, (N2, D2), dtype=jnp.float32)
    key2 = jax.random.normal(k4, (N2, T2, D2), dtype=jnp.float32)
    value2 = jax.random.normal(k5, (N2, T2, Dv2), dtype=jnp.float32)
    lens_2 = jax.random.randint(k6, (N2,), 1, T2 + 1, dtype=jnp.int32)

    out2, attn2 = attention_forward(query2, key2, value2, lens_2)
    out2, attn2 = jax.block_until_ready((out2, attn2))
    out2_r, attn2_r = attention_ref(query2, key2, value2, lens_2)
    np.testing.assert_allclose(np.asarray(out2), np.asarray(out2_r), rtol=1e-5, atol=1e-5)
    np.testing.assert_allclose(np.asarray(attn2), np.asarray(attn2_r), rtol=1e-5, atol=1e-5)

    print("KERNEL_OK")
</pallas_src>

<mosaic_0001>
module attributes {stable_mosaic.version = 11 : i64} {
  func.func @attention_kernel(%arg0: i32, %arg1: memref<2x1xi32, #tpu.memory_space<vmem>>, %arg2: memref<2x32xf32, #tpu.memory_space<vmem>>, %arg3: memref<2x8x32xf32, #tpu.memory_space<vmem>>, %arg4: memref<2x8x32xf32, #tpu.memory_space<vmem>>, %arg5: memref<2x32xf32, #tpu.memory_space<vmem>>, %arg6: memref<2x8xf32, #tpu.memory_space<vmem>>) attributes {dimension_semantics = [#tpu.dimension_semantics<parallel>], iteration_bounds = array<i64: 1>, scalar_prefetch = 0 : i64, scratch_operands = 0 : i64, tpu.core_type = #tpu.core_type<tc>, window_params = [{transform_indices = @transform_0, window_bounds = array<i64: 2, 1>}, {transform_indices = @transform_1, window_bounds = array<i64: 2, 32>}, {transform_indices = @transform_2, window_bounds = array<i64: 2, 8, 32>}, {transform_indices = @transform_3, window_bounds = array<i64: 2, 8, 32>}, {transform_indices = @transform_4, window_bounds = array<i64: 2, 32>}, {transform_indices = @transform_5, window_bounds = array<i64: 2, 8>}]} {
    %c0 = arith.constant 0 : index
    %c0_0 = arith.constant 0 : index
    %0 = vector.load %arg2[%c0, %c0_0] : memref<2x32xf32, #tpu.memory_space<vmem>>, vector<2x32xf32>
    %c0_1 = arith.constant 0 : index
    %c0_2 = arith.constant 0 : index
    %c0_3 = arith.constant 0 : index
    %1 = vector.load %arg3[%c0_1, %c0_2, %c0_3] : memref<2x8x32xf32, #tpu.memory_space<vmem>>, vector<2x8x32xf32>
    %c0_4 = arith.constant 0 : index
    %c0_5 = arith.constant 0 : index
    %c0_6 = arith.constant 0 : index
    %2 = vector.load %arg4[%c0_4, %c0_5, %c0_6] : memref<2x8x32xf32, #tpu.memory_space<vmem>>, vector<2x8x32xf32>
    %c0_7 = arith.constant 0 : index
    %c0_8 = arith.constant 0 : index
    %3 = vector.load %arg1[%c0_7, %c0_8] : memref<2x1xi32, #tpu.memory_space<vmem>>, vector<2x1xi32>
    %4 = vector.shape_cast %0 : vector<2x32xf32> to vector<2x1x32xf32>
    %5 = vector.broadcast %4 : vector<2x1x32xf32> to vector<2x8x32xf32>
    %6 = arith.mulf %1, %5 : vector<2x8x32xf32>
    %cst = arith.constant dense<0.000000e+00> : vector<2x8xf32>
    %7 = vector.multi_reduction <add>, %6, %cst [2] : vector<2x8x32xf32> to vector<2x8xf32>
    %8 = tpu.iota {dimensions = array<i32: 1>} : vector<2x8xi32>
    %9 = vector.broadcast %3 : vector<2x1xi32> to vector<2x8xi32>
    %10 = arith.cmpi sge, %8, %9 : vector<2x8xi32>
    %cst_9 = arith.constant -1.000000e+09 : f32
    %11 = vector.broadcast %cst_9 : f32 to vector<2x8xf32>
    %12 = arith.select %10, %11, %7 : vector<2x8xi1>, vector<2x8xf32>
    %cst_10 = arith.constant dense<0xFF800000> : vector<2xf32>
    %13 = vector.multi_reduction <maximumf>, %12, %cst_10 [1] : vector<2x8xf32> to vector<2xf32>
    %14 = vector.shape_cast %13 : vector<2xf32> to vector<2x1xf32>
    %15 = vector.broadcast %14 : vector<2x1xf32> to vector<2x8xf32>
    %16 = arith.subf %12, %15 : vector<2x8xf32>
    %17 = math.exp %16 : vector<2x8xf32>
    %cst_11 = arith.constant dense<0.000000e+00> : vector<2xf32>
    %18 = vector.multi_reduction <add>, %17, %cst_11 [1] : vector<2x8xf32> to vector<2xf32>
    %19 = vector.shape_cast %18 : vector<2xf32> to vector<2x1xf32>
    %20 = vector.broadcast %19 : vector<2x1xf32> to vector<2x8xf32>
    %21 = arith.divf %17, %20 : vector<2x8xf32>
    %c0_12 = arith.constant 0 : index
    %c0_13 = arith.constant 0 : index
    %22 = vector.load %arg6[%c0_12, %c0_13] : memref<2x8xf32, #tpu.memory_space<vmem>>, vector<2x8xf32>
    tpu.vector_store %arg6[%c0_12, %c0_13], %21 {strides = array<i32>} : memref<2x8xf32, #tpu.memory_space<vmem>>, vector<2x8xf32>,
    %23 = vector.shape_cast %21 : vector<2x8xf32> to vector<2x8x1xf32>
    %24 = vector.broadcast %23 : vector<2x8x1xf32> to vector<2x8x32xf32>
    %25 = arith.mulf %24, %2 : vector<2x8x32xf32>
    %cst_14 = arith.constant dense<0.000000e+00> : vector<2x32xf32>
    %26 = vector.multi_reduction <add>, %25, %cst_14 [1] : vector<2x8x32xf32> to vector<2x32xf32>
    %c0_15 = arith.constant 0 : index
    %c0_16 = arith.constant 0 : index
    %27 = vector.load %arg5[%c0_15, %c0_16] : memref<2x32xf32, #tpu.memory_space<vmem>>, vector<2x32xf32>
    tpu.vector_store %arg5[%c0_15, %c0_16], %26 {strides = array<i32>} : memref<2x32xf32, #tpu.memory_space<vmem>>, vector<2x32xf32>,
    return
  }
  func.func @transform_0(%arg0: i32) -> (i32, i32) {
    %c0_i32 = arith.constant 0 : i32
    %c0_i32_0 = arith.constant 0 : i32
    return %arg0, %c0_i32 : i32, i32
  }
  func.func @transform_1(%arg0: i32) -> (i32, i32) {
    %c0_i32 = arith.constant 0 : i32
    %c0_i32_0 = arith.constant 0 : i32
    return %arg0, %c0_i32 : i32, i32
  }
  func.func @transform_2(%arg0: i32) -> (i32, i32, i32) {
    %c0_i32 = arith.constant 0 : i32
    %c0_i32_0 = arith.constant 0 : i32
    %c0_i32_1 = arith.constant 0 : i32
    return %arg0, %c0_i32, %c0_i32_0 : i32, i32, i32
  }
  func.func @transform_3(%arg0: i32) -> (i32, i32, i32) {
    %c0_i32 = arith.constant 0 : i32
    %c0_i32_0 = arith.constant 0 : i32
    %c0_i32_1 = arith.constant 0 : i32
    return %arg0, %c0_i32, %c0_i32_0 : i32, i32, i32
  }
  func.func @transform_4(%arg0: i32) -> (i32, i32) {
    %c0_i32 = arith.constant 0 : i32
    %c0_i32_0 = arith.constant 0 : i32
    return %arg0, %c0_i32 : i32, i32
  }
  func.func @transform_5(%arg0: i32) -> (i32, i32) {
    %c0_i32 = arith.constant 0 : i32
    %c0_i32_0 = arith.constant 0 : i32
    return %arg0, %c0_i32 : i32, i32
  }
}

</mosaic_0001>

<llo_original>
// kernel: tpu_custom_call.1
$region0: #{tpu_custom_call.1}
  #allocation0 [shape = 'u32[]', space=smem, size = 0x4, offset = 0x4, fixed_abs, tag = 'smem constant byte address 0x4 - core index']
  #allocation1 [shape = 'u32[144,128]{1,0:T(1,128)}', space=vmem, size = 0x12000, scoped, tag = 'internal scratch']
  %s0 = inlined_call_operand.vmem [shape: s32[2,1], index: 0, kind: input, shape index: {}]
  %s1 = inlined_call_operand.vmem [shape: f32[2,32], index: 1, kind: input, shape index: {}]
  %s2 = inlined_call_operand.hbm [shape: f32[2,8,32], index: 2, kind: input, shape index: {}]
  %s3 = inlined_call_operand.hbm [shape: f32[2,8,32], index: 3, kind: input, shape index: {}]
  %s4 = inlined_call_operand.hbm [shape: f32[2,32], index: 4, kind: output, shape index: {0}]
  %s5 = inlined_call_operand.hbm [shape: f32[2,8], index: 5, kind: output, shape index: {1}]
  %6 = xla_tuple %s4, %s5
  %s7 = sld [smem:[#allocation0]]
  $region42: #{tpu_custom_call.1} parent=0
    _
  %s9 = ssub.s32 1, %s7
  %s10 = scalar_select 0, %s9, %s7
  $region1: #{tpu_custom_call.1} parent=0
    #allocation2 [shape = 'u8[8192]{0}', space=vmem, size = 0x2000, scoped, tag = 'input window, operand 2, single buffered']
    #allocation3 [shape = 's32[1]{0}', space=sflag, size = 0x4, scoped, tag = 'scoped memory for tpu_custom_call.1']
    #allocation4 [shape = 's32[1]{0}', space=sflag, size = 0x4, scoped, tag = 'scoped memory for tpu_custom_call.1']
    #allocation5 [shape = 'u8[8192]{0}', space=vmem, size = 0x2000, scoped, tag = 'input window, operand 3, single buffered']
    #allocation6 [shape = 's32[1]{0}', space=sflag, size = 0x4, scoped, tag = 'scoped memory for tpu_custom_call.1']
    #allocation7 [shape = 'u8[1024]{0}', space=vmem, size = 0x400, scoped, tag = 'output window, operand 0, single buffered']
    #allocation8 [shape = 'u8[1024]{0}', space=vmem, size = 0x400, scoped, tag = 'output window, operand 1, single buffered']
    #allocation9 [shape = 's32[1]{0}', space=sflag, size = 0x4, scoped, tag = 'scoped memory for tpu_custom_call.1']
    %11 = vsyncpa [#allocation3], 0
    %12 = vsyncpa [#allocation6], 0
    %13 = vsyncpa [#allocation4], 0
    %14 = vsyncpa [#allocation9], 0
    // Predicated region
    $region2: #{tpu_custom_call.1} parent=1 // pred_check
      _
    $region3: #{tpu_custom_call.1} parent=1 // pred_check_branch
      %16 = sbr.rel (0) target = $region5
    $region4: #{tpu_custom_call.1} parent=1 // pred_region
      _
    $region5: #{tpu_custom_call.1} parent=1 // pred_fallthru
      _
    // Predicated region
    $region6: #{tpu_custom_call.1} parent=1 // pred_check
      _
    $region7: #{tpu_custom_call.1} parent=1 // pred_check_branch
      %18 = sbr.rel (0) target = $region9
    $region8: #{tpu_custom_call.1} parent=1 // pred_region
      _
    $region9: #{tpu_custom_call.1} parent=1 // pred_fallthru
      _
    // Predicated region
    $region10: #{tpu_custom_call.1} parent=1 // pred_check
      _
    $region11: #{tpu_custom_call.1} parent=1 // pred_check_branch
      %20 = sbr.rel (0) target = $region13
    $region12: #{tpu_custom_call.1} parent=1 // pred_region
      %s22 = ssub.s32 256, 256
      %23 = vsyncadd [#allocation3], %s22
      %s24 = sshll.u32 [#allocation2], 4
      %s25 = int_to_ptr.vmem [resolvable:$true] %s24
      %30 = dma.hbm_to_vmem [thread:$0]  %s2, 256, %s25, [#allocation3], 128, 128, 8
    $region13: #{tpu_custom_call.1} parent=1 // pred_fallthru
      _
    // Predicated region
    $region14: #{tpu_custom_call.1} parent=1 // pred_check
      _
    $region15: #{tpu_custom_call.1} parent=1 // pred_check_branch
      %32 = sbr.rel (0) target = $region17
    $region16: #{tpu_custom_call.1} parent=1 // pred_region
      %s34 = ssub.s32 256, 256
      %35 = vsyncadd [#allocation6], %s34
      %s36 = sshll.u32 [#allocation5], 4
      %s37 = int_to_ptr.vmem [resolvable:$true] %s36
      %42 = dma.hbm_to_vmem [thread:$0]  %s3, 256, %s37, [#allocation6], 128, 128, 8
    $region17: #{tpu_custom_call.1} parent=1 // pred_fallthru
      _
    // Predicated region
    $region18: #{tpu_custom_call.1} parent=1 // pred_check
      _
    $region19: #{tpu_custom_call.1} parent=1 // pred_check_branch
      %44 = sbr.rel (0) target = $region21
    $region20: #{tpu_custom_call.1} parent=1 // pred_region
      %45 = dma.done [#allocation3], 256
    $region21: #{tpu_custom_call.1} parent=1 // pred_fallthru
      _
    // Predicated region
    $region22: #{tpu_custom_call.1} parent=1 // pred_check
      _
    $region23: #{tpu_custom_call.1} parent=1 // pred_check_branch
      %47 = sbr.rel (0) target = $region25
    $region24: #{tpu_custom_call.1} parent=1 // pred_region
      %48 = dma.done [#allocation6], 256
    $region25: #{tpu_custom_call.1} parent=1 // pred_fallthru
      _
    %v49 = vld [vmem:[%s1] sm:$0x3]
    %v50 = vld [vmem:[#allocation2] sm:$0xff]
    %v51 = vld [vmem:[#allocation2 + $0x8] sm:$0xff]
    %v52 = vld [vmem:[#allocation5] sm:$0xff]
    %v53 = vld [vmem:[#allocation5 + $0x8] sm:$0xff]
    %v54 = vld [vmem:[%s0] sm:$0x3]
    %v57 = vunpack.c.l.s4 1966171168
    %v58 = vunpack.c.0.s8 %v57
    %v59 = vlaneseq
    %v60 = vshrl.u32 %v59, 7
    %v61 = vsub.s32 %v58, %v60
    %v62 = vrot.slane %v49, %v61
    %v63 = vcombine.high %v62, %v62
    %v65 = vunpack.c.l.s4 1966171168
    %v66 = vunpack.c.0.s8 %v65
    %v67 = vlaneseq
    %v68 = vshrl.u32 %v67, 7
    %v69 = vsub.s32 %v66, %v68
    %v70 = vrot.slane %v62, %v69
    %v72 = vunpack.c.l.s4 1966171168
    %v73 = vunpack.c.0.s8 %v72
    %v74 = vlaneseq
    %v75 = vshrl.u32 %v74, 7
    %v76 = vsub.s32 %v73, %v75
    %v77 = vrot.slane %v63, %v76
    %v78 = vlaneseq
    %v79 = vshrl.u32 %v78, 7
    %v80 = vsub.s32 0, %v79
    %v81 = vrot.slane %v70, %v80
    %v82 = vlaneseq
    %v83 = vshrl.u32 %v82, 7
    %v84 = vsub.s32 0, %v83
    %v85 = vrot.slane %v77, %v84
    %v88 = vmul.f32 %v50, %v81
    %v89 = vmul.f32 %v51, %v85
    %vm90 = vcmask 261120
    %v91 = vsel %vm90, %v88, 0.0
    %92 = vadd.xlane.f32.xlu0 %v91
    %v93 = vpop.xlane.xlu0 %92
    %v94 = vsel %vm90, %v89, 0.0
    %95 = vadd.xlane.f32.xlu0 %v94
    %v96 = vpop.xlane.xlu0 %95
    %v97 = vlaneseq
    %v98 = vand.u32 %v97, 127
    %99 = vset.pattern.permute.xlu0 0
    %100 = vperm.xlu0 %99, %v54
    %v101 = vpop.permute.xlu0 %100
    %vm102 = vcmp.ge.s32.totalorder %v98, %v101
    %v105 = vlaneseq
    %v106 = vshrl.u32 %v105, 7
    %v107 = vsub.s32 %v98, %v106
    %v108 = vrot.slane %v93, %v107
    %v109 = vlaneseq
    %v110 = vshrl.u32 %v109, 7
    %v111 = vsub.s32 %v98, %v110
    %v112 = vrot.slane %v96, %v111
    %vm113 = vcmask 1041409
    %v114 = vsel %vm113, %v112, %v108
    %v116 = vsel %vm102, -1e+09, %v114
    %vm117 = vcmask 58368
    %v118 = vsel %vm117, %v116, -inf
    %119 = vmax.xlane.f32.xlu0 %v118
    %v120 = vpop.xlane.xlu0 %119
    %v121 = vsub.f32 %v116, %v120
    %v122 = vmul.f32 %v121, 1.442695
    %v123 = vpow.pop %v122
    %v124 = vsel %vm117, %v123, 0.0
    %125 = vadd.xlane.f32.xlu0 %v124
    %v126 = vpop.xlane.xlu0 %125
    %v127 = vrcp.pop %v126
    %v128 = vmul.f32 %v123, %v127
    %129 = vst.msk [vmem:[#allocation8] sm:$0x3] %vm117, %v128
    %v130 = vlaneseq
    %v131 = vshrl.u32 %v130, 7
    %v132 = vsub.s32 0, %v131
    %v133 = vrot.slane %v128, %v132
    %135 = vbcast.lane.b32.xlu0 %v133, 256
    %v136 = vpop.permute.xlu0 %135
    %v137 = vlaneseq
    %v138 = vshrl.u32 %v137, 7
    %v139 = vsub.s32 1, %v138
    %v140 = vrot.slane %v128, %v139
    %142 = vbcast.lane.b32.xlu0 %v140, 256
    %v143 = vpop.permute.xlu0 %142
    %v144 = vmul.f32 %v136, %v52
    %v145 = vmul.f32 %v143, %v53
    %v146 = vsel %vm90, %v144, 0.0
    %v147 = vrot.slane %v146, 4
    %v148 = vadd.f32 %v146, %v147
    %v149 = vrot.slane %v148, 2
    %v150 = vadd.f32 %v148, %v149
    %v151 = vrot.slane %v150, 1
    %v152 = vadd.f32 %v150, %v151
    %v153 = vsel %vm90, %v145, 0.0
    %v154 = vrot.slane %v153, 4
    %v155 = vadd.f32 %v153, %v154
    %v156 = vrot.slane %v155, 2
    %v157 = vadd.f32 %v155, %v156
    %v158 = vrot.slane %v157, 1
    %v159 = vadd.f32 %v157, %v158
    %v162 = vsel %vm113, %v159, %v152
    %vm164 = vcmask 254976
    %165 = vst.msk [vmem:[#allocation7] sm:$0x3] %vm164, %v162
    // Predicated region
    $region26: #{tpu_custom_call.1} parent=1 // pred_check
      _
    $region27: #{tpu_custom_call.1} parent=1 // pred_check_branch
      %167 = sbr.rel (0) target = $region29
    $region28: #{tpu_custom_call.1} parent=1 // pred_region
      %s169 = ssub.s32 32, 32
      %170 = vsyncadd [#allocation4], %s169
      %s172 = sshll.u32 [#allocation7], 4
      %s173 = int_to_ptr.vmem [resolvable:$true] %s172
      %175 = dma.vmem_to_hbm [thread:$0]  %s173, 32, %s4, [#allocation4]
    $region29: #{tpu_custom_call.1} parent=1 // pred_fallthru
      _
    // Predicated region
    $region30: #{tpu_custom_call.1} parent=1 // pred_check
      _
    $region31: #{tpu_custom_call.1} parent=1 // pred_check_branch
      %177 = sbr.rel (0) target = $region33
    $region32: #{tpu_custom_call.1} parent=1 // pred_region
      %s179 = ssub.s32 32, 32
      %180 = vsyncadd [#allocation9], %s179
      %s182 = sshll.u32 [#allocation8], 4
      %s183 = int_to_ptr.vmem [resolvable:$true] %s182
      %185 = dma.vmem_to_hbm [thread:$0]  %s183, 32, %s5, [#allocation9]
    $region33: #{tpu_custom_call.1} parent=1 // pred_fallthru
      _
    // Predicated region
    $region34: #{tpu_custom_call.1} parent=1 // pred_check
      _
    $region35: #{tpu_custom_call.1} parent=1 // pred_check_branch
      %187 = sbr.rel (0) target = $region37
    $region36: #{tpu_custom_call.1} parent=1 // pred_region
      %188 = dma.done [#allocation4], 32
    $region37: #{tpu_custom_call.1} parent=1 // pred_fallthru
      _
    // Predicated region
    $region38: #{tpu_custom_call.1} parent=1 // pred_check
      _
    $region39: #{tpu_custom_call.1} parent=1 // pred_check_branch
      %190 = sbr.rel (0) target = $region41
    $region40: #{tpu_custom_call.1} parent=1 // pred_region
      %191 = dma.done [#allocation9], 32
    $region41: #{tpu_custom_call.1} parent=1 // pred_fallthru
      _
    %192 = vsyncpa [#allocation3], 1
    %193 = vsyncpa [#allocation6], 1
    %194 = vsyncpa [#allocation4], 1
    %195 = vsyncpa [#allocation9], 1

</llo_original>
